<compile_context>
chip_gen: v5e
topology: v5e:2x2
jax: 0.10.0
libtpu: 0.0.40
codegen_flags: <defaults>
</compile_context>

<pallas_src>
import functools

import jax
import jax.numpy as jnp
from jax.experimental import pallas as pl
from jax.experimental.pallas import tpu as pltpu

EPS = 1e-5
LANE = 128


def _round_up(n, m=LANE):
    return ((n + m - 1) // m) * m


def _linear_relu_bn(x, w, b, gamma, beta, inv_batch):
    """Linear -> ReLU -> BatchNorm1d (training-mode, biased var), single-pass stats."""
    h = jnp.dot(x, w, preferred_element_type=jnp.float32) + b
    h = jnp.maximum(h, 0.0)
    # Single-pass batch statistics: one pair of axis-0 reductions instead of two passes.
    s1 = jnp.sum(h, axis=0, keepdims=True)
    s2 = jnp.sum(h * h, axis=0, keepdims=True)
    mean = s1 * inv_batch
    var = jnp.maximum(s2 * inv_batch - mean * mean, 0.0)  # biased variance, clamp cancellation
    h = (h - mean) * jax.lax.rsqrt(var + EPS) * gamma + beta
    # dropout p = 0.0 -> identity
    return h


def simple_mlp_kernel(x_ref,
                      w1_ref, b1_ref, g1_ref, be1_ref,
                      w2_ref, b2_ref, g2_ref, be2_ref,
                      w3_ref, b3_ref,
                      o_ref, *, inv_batch):
    # Load small parameter rows once and reuse (hoisted broadcasts).
    b1, g1, be1 = b1_ref[...], g1_ref[...], be1_ref[...]
    b2, g2, be2 = b2_ref[...], g2_ref[...], be2_ref[...]
    b3 = b3_ref[...]

    x = x_ref[...]
    h = _linear_relu_bn(x, w1_ref[...], b1, g1, be1, inv_batch)
    h = _linear_relu_bn(h, w2_ref[...], b2, g2, be2, inv_batch)
    out = jnp.dot(h, w3_ref[...], preferred_element_type=jnp.float32) + b3
    o_ref[...] = out.astype(o_ref.dtype)  # full lane-dense (B, 128k) store


def _pad_params(params):
    """Zero-pad every feature dim up to a multiple of 128 (exact: see header comment)."""
    (w1, b1, g1, be1, w2, b2, g2, be2, w3, b3) = params
    d_in, h1 = w1.shape
    _, h2 = w2.shape
    _, d_out = w3.shape
    d_in_p, h1_p, h2_p, d_out_p = (_round_up(d) for d in (d_in, h1, h2, d_out))

    def pad_w(w, rp, cp):
        return jnp.pad(w, ((0, rp - w.shape[0]), (0, cp - w.shape[1])))

    def pad_row(v, cp, fill=0.0):
        return jnp.pad(v, ((0, 0), (0, cp - v.shape[1])), constant_values=fill)

    padded = (
        pad_w(w1, d_in_p, h1_p), pad_row(b1, h1_p), pad_row(g1, h1_p, 1.0), pad_row(be1, h1_p),
        pad_w(w2, h1_p, h2_p), pad_row(b2, h2_p), pad_row(g2, h2_p, 1.0), pad_row(be2, h2_p),
        pad_w(w3, h2_p, d_out_p), pad_row(b3, d_out_p),
    )
    return padded, d_in_p, d_out_p


def simple_mlp_forward(x, params, num_risks):
    """Full MLP forward in a single lane-dense Pallas kernel; unpad + reshape in JAX."""
    B, d_in = x.shape
    out_total = params[-2].shape[1]  # logical num_risks * out_features

    padded, d_in_p, d_out_p = _pad_params(params)
    x_p = jnp.pad(x, ((0, 0), (0, d_in_p - d_in)))

    full = lambda a: pl.BlockSpec(a.shape, lambda: (0,) * a.ndim)

    w1p, w2p, w3p = padded[0], padded[4], padded[8]
    flops = 2 * B * (w1p.shape[0] * w1p.shape[1]
                     + w2p.shape[0] * w2p.shape[1]
                     + w3p.shape[0] * w3p.shape[1])
    bytes_accessed = 4 * (x_p.size + sum(int(p.size) for p in padded) + B * d_out_p)
    cost = pl.CostEstimate(flops=flops, transcendentals=0, bytes_accessed=bytes_accessed)

    kernel = functools.partial(simple_mlp_kernel, inv_batch=1.0 / B)

    out2d = pl.pallas_call(
        kernel,
        out_shape=jax.ShapeDtypeStruct((B, d_out_p), jnp.float32),
        in_specs=[full(x_p)] + [full(p) for p in padded],
        out_specs=pl.BlockSpec((B, d_out_p), lambda: (0, 0)),
        compiler_params=pltpu.CompilerParams(vmem_limit_bytes=32 << 20),
        cost_estimate=cost,
    )(x_p, *padded)

    out2d = out2d[:, :out_total]                      # drop lane padding
    return out2d.reshape(B, num_risks, out_total // num_risks)


def init_params(key, in_features, num_nodes, num_risks, out_features):
    """Deterministic parameter init (Kaiming-uniform-ish, like nn.Linear defaults)."""
    dims = [in_features] + list(num_nodes) + [num_risks * out_features]
    params = []
    keys = jax.random.split(key, 2 * (len(dims) - 1))
    for i in range(len(dims) - 1):
        fan_in, fan_out = dims[i], dims[i + 1]
        bound = 1.0 / jnp.sqrt(jnp.float32(fan_in))
        w = jax.random.uniform(keys[2 * i], (fan_in, fan_out),
                               minval=-bound, maxval=bound, dtype=jnp.float32)
        b = jax.random.uniform(keys[2 * i + 1], (1, fan_out),
                               minval=-bound, maxval=bound, dtype=jnp.float32)
        params.append(w)
        params.append(b)
        if i < len(dims) - 2:  # hidden layer -> BatchNorm1d params (gamma=1, beta=0)
            params.append(jnp.ones((1, fan_out), jnp.float32))
            params.append(jnp.zeros((1, fan_out), jnp.float32))
    return tuple(params)


def reference_forward(x, params, num_risks):
    """Pure-JAX reference with identical semantics (for sanity check)."""
    (w1, b1, g1, be1, w2, b2, g2, be2, w3, b3) = params
    h = jnp.maximum(x @ w1 + b1, 0.0)
    m, v = jnp.mean(h, 0, keepdims=True), jnp.var(h, 0, keepdims=True)
    h = (h - m) / jnp.sqrt(v + EPS) * g1 + be1
    h = jnp.maximum(h @ w2 + b2, 0.0)
    m, v = jnp.mean(h, 0, keepdims=True), jnp.var(h, 0, keepdims=True)
    h = (h - m) / jnp.sqrt(v + EPS) * g2 + be2
    out = h @ w3 + b3
    return out.reshape(x.shape[0], num_risks, -1)


if __name__ == "__main__":
    # Small shapes consistent with the module's forward:
    #   x: (batch, in_features); output: (batch, num_risks, out_features)
    batch = 8
    in_features = 16
    num_nodes = [32, 32]
    num_risks = 2
    out_features = 8

    key = jax.random.PRNGKey(0)
    kx, kp = jax.random.split(key)
    x = jax.random.normal(kx, (batch, in_features), dtype=jnp.float32)
    params = init_params(kp, in_features, num_nodes, num_risks, out_features)

    out = simple_mlp_forward(x, params, num_risks)
    out = jax.block_until_ready(out)

    ref = reference_forward(x, params, num_risks)
    assert out.shape == (batch, num_risks, out_features), out.shape
    assert jnp.allclose(out, ref, atol=1e-3, rtol=1e-3), "mismatch vs reference"

    print("KERNEL_OK")
</pallas_src>

<mosaic_0001>
module attributes {stable_mosaic.version = 11 : i64} {
  func.func @simple_mlp_kernel(%arg0: memref<8x128xf32, #tpu.memory_space<vmem>>, %arg1: memref<128x128xf32, #tpu.memory_space<vmem>>, %arg2: memref<1x128xf32, #tpu.memory_space<vmem>>, %arg3: memref<1x128xf32, #tpu.memory_space<vmem>>, %arg4: memref<1x128xf32, #tpu.memory_space<vmem>>, %arg5: memref<128x128xf32, #tpu.memory_space<vmem>>, %arg6: memref<1x128xf32, #tpu.memory_space<vmem>>, %arg7: memref<1x128xf32, #tpu.memory_space<vmem>>, %arg8: memref<1x128xf32, #tpu.memory_space<vmem>>, %arg9: memref<128x128xf32, #tpu.memory_space<vmem>>, %arg10: memref<1x128xf32, #tpu.memory_space<vmem>>, %arg11: memref<8x128xf32, #tpu.memory_space<vmem>>) attributes {dimension_semantics = [], scalar_prefetch = 0 : i64, scratch_operands = 0 : i64, tpu.core_type = #tpu.core_type<tc>} {
    %c0 = arith.constant 0 : index
    %c0_0 = arith.constant 0 : index
    %0 = vector.load %arg2[%c0, %c0_0] : memref<1x128xf32, #tpu.memory_space<vmem>>, vector<1x128xf32>
    %c0_1 = arith.constant 0 : index
    %c0_2 = arith.constant 0 : index
    %1 = vector.load %arg3[%c0_1, %c0_2] : memref<1x128xf32, #tpu.memory_space<vmem>>, vector<1x128xf32>
    %c0_3 = arith.constant 0 : index
    %c0_4 = arith.constant 0 : index
    %2 = vector.load %arg4[%c0_3, %c0_4] : memref<1x128xf32, #tpu.memory_space<vmem>>, vector<1x128xf32>
    %c0_5 = arith.constant 0 : index
    %c0_6 = arith.constant 0 : index
    %3 = vector.load %arg6[%c0_5, %c0_6] : memref<1x128xf32, #tpu.memory_space<vmem>>, vector<1x128xf32>
    %c0_7 = arith.constant 0 : index
    %c0_8 = arith.constant 0 : index
    %4 = vector.load %arg7[%c0_7, %c0_8] : memref<1x128xf32, #tpu.memory_space<vmem>>, vector<1x128xf32>
    %c0_9 = arith.constant 0 : index
    %c0_10 = arith.constant 0 : index
    %5 = vector.load %arg8[%c0_9, %c0_10] : memref<1x128xf32, #tpu.memory_space<vmem>>, vector<1x128xf32>
    %c0_11 = arith.constant 0 : index
    %c0_12 = arith.constant 0 : index
    %6 = vector.load %arg10[%c0_11, %c0_12] : memref<1x128xf32, #tpu.memory_space<vmem>>, vector<1x128xf32>
    %c0_13 = arith.constant 0 : index
    %c0_14 = arith.constant 0 : index
    %7 = vector.load %arg0[%c0_13, %c0_14] : memref<8x128xf32, #tpu.memory_space<vmem>>, vector<8x128xf32>
    %c0_15 = arith.constant 0 : index
    %c0_16 = arith.constant 0 : index
    %8 = vector.load %arg1[%c0_15, %c0_16] : memref<128x128xf32, #tpu.memory_space<vmem>>, vector<128x128xf32>
    %cst = arith.constant dense<0.000000e+00> : vector<8x128xf32>
    %9 = tpu.matmul %7, %8, %cst {dimension_numbers = #tpu.dot_dimension_numbers<[1], [0], [0], [1], [0, 0, 1, 1], [], []>} : vector<8x128xf32>, vector<128x128xf32>, vector<8x128xf32> -> vector<8x128xf32>
    %10 = vector.broadcast %0 : vector<1x128xf32> to vector<8x128xf32>
    %11 = arith.addf %9, %10 : vector<8x128xf32>
    %cst_17 = arith.constant 0.000000e+00 : f32
    %12 = vector.broadcast %cst_17 : f32 to vector<8x128xf32>
    %13 = arith.maximumf %11, %12 : vector<8x128xf32>
    %cst_18 = arith.constant dense<0.000000e+00> : vector<128xf32>
    %14 = vector.multi_reduction <add>, %13, %cst_18 [0] : vector<8x128xf32> to vector<128xf32>
    %15 = vector.shape_cast %14 : vector<128xf32> to vector<1x128xf32>
    %16 = arith.mulf %13, %13 : vector<8x128xf32>
    %cst_19 = arith.constant dense<0.000000e+00> : vector<128xf32>
    %17 = vector.multi_reduction <add>, %16, %cst_19 [0] : vector<8x128xf32> to vector<128xf32>
    %18 = vector.shape_cast %17 : vector<128xf32> to vector<1x128xf32>
    %cst_20 = arith.constant 1.250000e-01 : f32
    %19 = vector.broadcast %cst_20 : f32 to vector<1x128xf32>
    %20 = arith.mulf %15, %19 : vector<1x128xf32>
    %cst_21 = arith.constant 1.250000e-01 : f32
    %21 = vector.broadcast %cst_21 : f32 to vector<1x128xf32>
    %22 = arith.mulf %18, %21 : vector<1x128xf32>
    %23 = arith.mulf %20, %20 : vector<1x128xf32>
    %24 = arith.subf %22, %23 : vector<1x128xf32>
    %cst_22 = arith.constant 0.000000e+00 : f32
    %25 = vector.broadcast %cst_22 : f32 to vector<1x128xf32>
    %26 = arith.maximumf %24, %25 : vector<1x128xf32>
    %27 = vector.broadcast %20 : vector<1x128xf32> to vector<8x128xf32>
    %28 = arith.subf %13, %27 : vector<8x128xf32>
    %cst_23 = arith.constant 9.99999974E-6 : f32
    %29 = vector.broadcast %cst_23 : f32 to vector<1x128xf32>
    %30 = arith.addf %26, %29 : vector<1x128xf32>
    %31 = math.rsqrt %30 : vector<1x128xf32>
    %32 = vector.broadcast %31 : vector<1x128xf32> to vector<8x128xf32>
    %33 = arith.mulf %28, %32 : vector<8x128xf32>
    %34 = vector.broadcast %1 : vector<1x128xf32> to vector<8x128xf32>
    %35 = arith.mulf %33, %34 : vector<8x128xf32>
    %36 = vector.broadcast %2 : vector<1x128xf32> to vector<8x128xf32>
    %37 = arith.addf %35, %36 : vector<8x128xf32>
    %c0_24 = arith.constant 0 : index
    %c0_25 = arith.constant 0 : index
    %38 = vector.load %arg5[%c0_24, %c0_25] : memref<128x128xf32, #tpu.memory_space<vmem>>, vector<128x128xf32>
    %cst_26 = arith.constant dense<0.000000e+00> : vector<8x128xf32>
    %39 = tpu.matmul %37, %38, %cst_26 {dimension_numbers = #tpu.dot_dimension_numbers<[1], [0], [0], [1], [0, 0, 1, 1], [], []>} : vector<8x128xf32>, vector<128x128xf32>, vector<8x128xf32> -> vector<8x128xf32>
    %40 = vector.broadcast %3 : vector<1x128xf32> to vector<8x128xf32>
    %41 = arith.addf %39, %40 : vector<8x128xf32>
    %cst_27 = arith.constant 0.000000e+00 : f32
    %42 = vector.broadcast %cst_27 : f32 to vector<8x128xf32>
    %43 = arith.maximumf %41, %42 : vector<8x128xf32>
    %cst_28 = arith.constant dense<0.000000e+00> : vector<128xf32>
    %44 = vector.multi_reduction <add>, %43, %cst_28 [0] : vector<8x128xf32> to vector<128xf32>
    %45 = vector.shape_cast %44 : vector<128xf32> to vector<1x128xf32>
    %46 = arith.mulf %43, %43 : vector<8x128xf32>
    %cst_29 = arith.constant dense<0.000000e+00> : vector<128xf32>
    %47 = vector.multi_reduction <add>, %46, %cst_29 [0] : vector<8x128xf32> to vector<128xf32>
    %48 = vector.shape_cast %47 : vector<128xf32> to vector<1x128xf32>
    %cst_30 = arith.constant 1.250000e-01 : f32
    %49 = vector.broadcast %cst_30 : f32 to vector<1x128xf32>
    %50 = arith.mulf %45, %49 : vector<1x128xf32>
    %cst_31 = arith.constant 1.250000e-01 : f32
    %51 = vector.broadcast %cst_31 : f32 to vector<1x128xf32>
    %52 = arith.mulf %48, %51 : vector<1x128xf32>
    %53 = arith.mulf %50, %50 : vector<1x128xf32>
    %54 = arith.subf %52, %53 : vector<1x128xf32>
    %cst_32 = arith.constant 0.000000e+00 : f32
    %55 = vector.broadcast %cst_32 : f32 to vector<1x128xf32>
    %56 = arith.maximumf %54, %55 : vector<1x128xf32>
    %57 = vector.broadcast %50 : vector<1x128xf32> to vector<8x128xf32>
    %58 = arith.subf %43, %57 : vector<8x128xf32>
    %cst_33 = arith.constant 9.99999974E-6 : f32
    %59 = vector.broadcast %cst_33 : f32 to vector<1x128xf32>
    %60 = arith.addf %56, %59 : vector<1x128xf32>
    %61 = math.rsqrt %60 : vector<1x128xf32>
    %62 = vector.broadcast %61 : vector<1x128xf32> to vector<8x128xf32>
    %63 = arith.mulf %58, %62 : vector<8x128xf32>
    %64 = vector.broadcast %4 : vector<1x128xf32> to vector<8x128xf32>
    %65 = arith.mulf %63, %64 : vector<8x128xf32>
    %66 = vector.broadcast %5 : vector<1x128xf32> to vector<8x128xf32>
    %67 = arith.addf %65, %66 : vector<8x128xf32>
    %c0_34 = arith.constant 0 : index
    %c0_35 = arith.constant 0 : index
    %68 = vector.load %arg9[%c0_34, %c0_35] : memref<128x128xf32, #tpu.memory_space<vmem>>, vector<128x128xf32>
    %cst_36 = arith.constant dense<0.000000e+00> : vector<8x128xf32>
    %69 = tpu.matmul %67, %68, %cst_36 {dimension_numbers = #tpu.dot_dimension_numbers<[1], [0], [0], [1], [0, 0, 1, 1], [], []>} : vector<8x128xf32>, vector<128x128xf32>, vector<8x128xf32> -> vector<8x128xf32>
    %70 = vector.broadcast %6 : vector<1x128xf32> to vector<8x128xf32>
    %71 = arith.addf %69, %70 : vector<8x128xf32>
    %c0_37 = arith.constant 0 : index
    %c0_38 = arith.constant 0 : index
    %72 = vector.load %arg11[%c0_37, %c0_38] : memref<8x128xf32, #tpu.memory_space<vmem>>, vector<8x128xf32>
    tpu.vector_store %arg11[%c0_37, %c0_38], %71 {strides = array<i32>} : memref<8x128xf32, #tpu.memory_space<vmem>>, vector<8x128xf32>,
    return
  }
}

</mosaic_0001>

<llo_original>
// kernel: tpu_custom_call.1
$region0: #{tpu_custom_call.1}
  #allocation0 [shape = 'u32[]', space=smem, size = 0x4, offset = 0x4, fixed_abs, tag = 'smem constant byte address 0x4 - core index']
  #allocation1 [shape = 'u32[72,128]{1,0:T(1,128)}', space=vmem, size = 0x9000, scoped, tag = 'internal scratch']
  %s0 = inlined_call_operand.hbm [shape: f32[8,128], index: 0, kind: input, shape index: {}]
  %s1 = inlined_call_operand.hbm [shape: f32[128,128], index: 1, kind: input, shape index: {}]
  %s2 = inlined_call_operand.vmem [shape: f32[1,128], index: 2, kind: input, shape index: {}]
  %s3 = inlined_call_operand.vmem [shape: f32[1,128], index: 3, kind: input, shape index: {}]
  %s4 = inlined_call_operand.vmem [shape: f32[1,128], index: 4, kind: input, shape index: {}]
  %s5 = inlined_call_operand.hbm [shape: f32[128,128], index: 5, kind: input, shape index: {}]
  %s6 = inlined_call_operand.vmem [shape: f32[1,128], index: 6, kind: input, shape index: {}]
  %s7 = inlined_call_operand.vmem [shape: f32[1,128], index: 7, kind: input, shape index: {}]
  %s8 = inlined_call_operand.vmem [shape: f32[1,128], index: 8, kind: input, shape index: {}]
  %s9 = inlined_call_operand.hbm [shape: f32[128,128], index: 9, kind: input, shape index: {}]
  %s10 = inlined_call_operand.vmem [shape: f32[1,128], index: 10, kind: input, shape index: {}]
  %s11 = inlined_call_operand.hbm [shape: f32[8,128], index: 11, kind: output, shape index: {}]
  %s12 = sld [smem:[#allocation0]]
  $region70: #{tpu_custom_call.1} parent=0
    _
  %s14 = ssub.s32 1, %s12
  %s15 = scalar_select 0, %s14, %s12
  $region1: #{tpu_custom_call.1} parent=0
    #allocation2 [shape = 'u8[4096]{0}', space=vmem, size = 0x1000, scoped, tag = 'input window, operand 0, single buffered']
    #allocation3 [shape = 's32[1]{0}', space=sflag, size = 0x4, scoped, tag = 'scoped memory for tpu_custom_call.1']
    #allocation4 [shape = 's32[1]{0}', space=sflag, size = 0x4, scoped, tag = 'scoped memory for tpu_custom_call.1']
    #allocation5 [shape = 'u8[65536]{0}', space=vmem, size = 0x10000, scoped, tag = 'input window, operand 1, single buffered']
    #allocation6 [shape = 's32[1]{0}', space=sflag, size = 0x4, scoped, tag = 'scoped memory for tpu_custom_call.1']
    #allocation7 [shape = 'u8[65536]{0}', space=vmem, size = 0x10000, scoped, tag = 'input window, operand 5, single buffered']
    #allocation8 [shape = 'u8[65536]{0}', space=vmem, size = 0x10000, scoped, tag = 'input window, operand 9, single buffered']
    #allocation9 [shape = 's32[1]{0}', space=sflag, size = 0x4, scoped, tag = 'scoped memory for tpu_custom_call.1']
    #allocation10 [shape = 'u8[4096]{0}', space=vmem, size = 0x1000, scoped, tag = 'output window, operand 0, single buffered']
    %16 = vsyncpa [#allocation3], 0
    %17 = vsyncpa [#allocation6], 0
    %18 = vsyncpa [#allocation9], 0
    %19 = vsyncpa [#allocation4], 0
    // Predicated region
    $region2: #{tpu_custom_call.1} parent=1 // pred_check
      _
    $region3: #{tpu_custom_call.1} parent=1 // pred_check_branch
      %21 = sbr.rel (0) target = $region5
    $region4: #{tpu_custom_call.1} parent=1 // pred_region
      %23 = vsyncadd [#allocation3], 0
      %s25 = sshll.u32 %s0, 4
      %s26 = int_to_ptr.hbm [resolvable:$true] %s25
      %s27 = sshll.u32 [#allocation2], 4
      %s28 = int_to_ptr.vmem [resolvable:$true] %s27
      %30 = dma.hbm_to_vmem [thread:$0]  %s26, 128, %s28, [#allocation3]
    $region5: #{tpu_custom_call.1} parent=1 // pred_fallthru
      _
    // Predicated region
    $region6: #{tpu_custom_call.1} parent=1 // pred_check
      _
    $region7: #{tpu_custom_call.1} parent=1 // pred_check_branch
      %32 = sbr.rel (0) target = $region9
    $region8: #{tpu_custom_call.1} parent=1 // pred_region
      %34 = vsyncadd [#allocation6], 0
      %s35 = sshll.u32 %s1, 4
      %s36 = int_to_ptr.hbm [resolvable:$true] %s35
      %s37 = sshll.u32 [#allocation5], 4
      %s38 = int_to_ptr.vmem [resolvable:$true] %s37
      %43 = dma.hbm_to_vmem [thread:$0]  %s36, 2048, %s38, [#allocation6], 128, 128, 8
    $region9: #{tpu_custom_call.1} parent=1 // pred_fallthru
      _
    // Predicated region
    $region10: #{tpu_custom_call.1} parent=1 // pred_check
      _
    $region11: #{tpu_custom_call.1} parent=1 // pred_check_branch
      %45 = sbr.rel (0) target = $region13
    $region12: #{tpu_custom_call.1} parent=1 // pred_region
      _
    $region13: #{tpu_custom_call.1} parent=1 // pred_fallthru
      _
    // Predicated region
    $region14: #{tpu_custom_call.1} parent=1 // pred_check
      _
    $region15: #{tpu_custom_call.1} parent=1 // pred_check_branch
      %47 = sbr.rel (0) target = $region17
    $region16: #{tpu_custom_call.1} parent=1 // pred_region
      _
    $region17: #{tpu_custom_call.1} parent=1 // pred_fallthru
      _
    // Predicated region
    $region18: #{tpu_custom_call.1} parent=1 // pred_check
      _
    $region19: #{tpu_custom_call.1} parent=1 // pred_check_branch
      %49 = sbr.rel (0) target = $region21
    $region20: #{tpu_custom_call.1} parent=1 // pred_region
      _
    $region21: #{tpu_custom_call.1} parent=1 // pred_fallthru
      _
    // Predicated region
    $region22: #{tpu_custom_call.1} parent=1 // pred_check
      _
    $region23: #{tpu_custom_call.1} parent=1 // pred_check_branch
      %51 = sbr.rel (0) target = $region25
    $region24: #{tpu_custom_call.1} parent=1 // pred_region
      %53 = vsyncadd [#allocation6], 0
      %s54 = sshll.u32 %s5, 4
      %s55 = int_to_ptr.hbm [resolvable:$true] %s54
      %s56 = sshll.u32 [#allocation7], 4
      %s57 = int_to_ptr.vmem [resolvable:$true] %s56
      %62 = dma.hbm_to_vmem [thread:$0]  %s55, 2048, %s57, [#allocation6], 128, 128, 8
    $region25: #{tpu_custom_call.1} parent=1 // pred_fallthru
      _
    // Predicated region
    $region26: #{tpu_custom_call.1} parent=1 // pred_check
      _
    $region27: #{tpu_custom_call.1} parent=1 // pred_check_branch
      %64 = sbr.rel (0) target = $region29
    $region28: #{tpu_custom_call.1} parent=1 // pred_region
      _
    $region29: #{tpu_custom_call.1} parent=1 // pred_fallthru
      _
    // Predicated region
    $region30: #{tpu_custom_call.1} parent=1 // pred_check
      _
    $region31: #{tpu_custom_call.1} parent=1 // pred_check_branch
      %66 = sbr.rel (0) target = $region33
    $region32: #{tpu_custom_call.1} parent=1 // pred_region
      _
    $region33: #{tpu_custom_call.1} parent=1 // pred_fallthru
      _
    // Predicated region
    $region34: #{tpu_custom_call.1} parent=1 // pred_check
      _
    $region35: #{tpu_custom_call.1} parent=1 // pred_check_branch
      %68 = sbr.rel (0) target = $region37
    $region36: #{tpu_custom_call.1} parent=1 // pred_region
      _
    $region37: #{tpu_custom_call.1} parent=1 // pred_fallthru
      _
    // Predicated region
    $region38: #{tpu_custom_call.1} parent=1 // pred_check
      _
    $region39: #{tpu_custom_call.1} parent=1 // pred_check_branch
      %70 = sbr.rel (0) target = $region41
    $region40: #{tpu_custom_call.1} parent=1 // pred_region
      %72 = vsyncadd [#allocation9], 0
      %s73 = sshll.u32 %s9, 4
      %s74 = int_to_ptr.hbm [resolvable:$true] %s73
      %s75 = sshll.u32 [#allocation8], 4
      %s76 = int_to_ptr.vmem [resolvable:$true] %s75
      %81 = dma.hbm_to_vmem [thread:$0]  %s74, 2048, %s76, [#allocation9], 128, 128, 8
    $region41: #{tpu_custom_call.1} parent=1 // pred_fallthru
      _
    // Predicated region
    $region42: #{tpu_custom_call.1} parent=1 // pred_check
      _
    $region43: #{tpu_custom_call.1} parent=1 // pred_check_branch
      %83 = sbr.rel (0) target = $region45
    $region44: #{tpu_custom_call.1} parent=1 // pred_region
      _
    $region45: #{tpu_custom_call.1} parent=1 // pred_fallthru
      _
    // Predicated region
    $region46: #{tpu_custom_call.1} parent=1 // pred_check
      _
    $region47: #{tpu_custom_call.1} parent=1 // pred_check_branch
      %85 = sbr.rel (0) target = $region49
    $region48: #{tpu_custom_call.1} parent=1 // pred_region
      %87 = dma.done [#allocation3], 128
    $region49: #{tpu_custom_call.1} parent=1 // pred_fallthru
      _
    // Predicated region
    $region50: #{tpu_custom_call.1} parent=1 // pred_check
      _
    $region51: #{tpu_custom_call.1} parent=1 // pred_check_branch
      %89 = sbr.rel (0) target = $region53
    $region52: #{tpu_custom_call.1} parent=1 // pred_region
      %91 = dma.done [#allocation6], 2048
    $region53: #{tpu_custom_call.1} parent=1 // pred_fallthru
      _
    // Predicated region
    $region54: #{tpu_custom_call.1} parent=1 // pred_check
      _
    $region55: #{tpu_custom_call.1} parent=1 // pred_check_branch
      %93 = sbr.rel (0) target = $region57
    $region56: #{tpu_custom_call.1} parent=1 // pred_region
      %95 = dma.done [#allocation6], 2048
    $region57: #{tpu_custom_call.1} parent=1 // pred_fallthru
      _
    // Predicated region
    $region58: #{tpu_custom_call.1} parent=1 // pred_check
      _
    $region59: #{tpu_custom_call.1} parent=1 // pred_check_branch
      %97 = sbr.rel (0) target = $region61
    $region60: #{tpu_custom_call.1} parent=1 // pred_region
      %99 = dma.done [#allocation9], 2048
    $region61: #{tpu_custom_call.1} parent=1 // pred_fallthru
      _
    %v100 = vld [vmem:[%s2] sm:$0x1]
    %v101 = vld [vmem:[%s3] sm:$0x1]
    %v102 = vld [vmem:[%s4] sm:$0x1]
    %v103 = vld [vmem:[%s6] sm:$0x1]
    %v104 = vld [vmem:[%s7] sm:$0x1]
    %v105 = vld [vmem:[%s8] sm:$0x1]
    %v106 = vld [vmem:[%s10] sm:$0x1]
    %v107 = vld [vmem:[#allocation2] sm:$0xff]
    %v108 = vld [vmem:[#allocation5] sm:$0xff]
    %v109 = vld [vmem:[#allocation5 + $0x8] sm:$0xff]
    %v110 = vld [vmem:[#allocation5 + $0x10] sm:$0xff]
    %v111 = vld [vmem:[#allocation5 + $0x18] sm:$0xff]
    %v112 = vld [vmem:[#allocation5 + $0x20] sm:$0xff]
    %v113 = vld [vmem:[#allocation5 + $0x28] sm:$0xff]
    %v114 = vld [vmem:[#allocation5 + $0x30] sm:$0xff]
    %v115 = vld [vmem:[#allocation5 + $0x38] sm:$0xff]
    %v116 = vld [vmem:[#allocation5 + $0x40] sm:$0xff]
    %v117 = vld [vmem:[#allocation5 + $0x48] sm:$0xff]
    %v118 = vld [vmem:[#allocation5 + $0x50] sm:$0xff]
    %v119 = vld [vmem:[#allocation5 + $0x58] sm:$0xff]
    %v120 = vld [vmem:[#allocation5 + $0x60] sm:$0xff]
    %v121 = vld [vmem:[#allocation5 + $0x68] sm:$0xff]
    %v122 = vld [vmem:[#allocation5 + $0x70] sm:$0xff]
    %v123 = vld [vmem:[#allocation5 + $0x78] sm:$0xff]
    %v125 = vperm.slane %v100, 0
    %127 = vmatpush.msra.mxu0 %v123
    %128 = vmatpush.msra.mxu0 %v122
    %129 = vmatpush.msra.mxu0 %v121
    %130 = vmatpush.msra.mxu0 %v120
    %131 = vmatpush.msra.mxu0 %v119
    %132 = vmatpush.msra.mxu0 %v118
    %133 = vmatpush.msra.mxu0 %v117
    %134 = vmatpush.msra.mxu0 %v116
    %135 = vmatpush.msra.mxu0 %v115
    %136 = vmatpush.msra.mxu0 %v114
    %137 = vmatpush.msra.mxu0 %v113
    %138 = vmatpush.msra.mxu0 %v112
    %139 = vmatpush.msra.mxu0 %v111
    %140 = vmatpush.msra.mxu0 %v110
    %141 = vmatpush.msra.mxu0 %v109
    %142 = vmatpush.msra.mxu0 %v108
    %143 = vmatmul.f32.gmra.mxu0 %v107
    %v144 = vpop.f32.mrf.mxu0
    %v145 = vadd.f32 %v125, %v144
    %146 = vdwg.mxu0
    %v147 = vmax.f32 %v145, 0.0
    %v148 = vrot.slane %v147, 4
    %v149 = vadd.f32 %v147, %v148
    %v150 = vrot.slane %v149, 2
    %v151 = vadd.f32 %v149, %v150
    %v152 = vrot.slane %v151, 1
    %v153 = vadd.f32 %v151, %v152
    %v154 = vmul.f32 %v147, %v147
    %v155 = vrot.slane %v154, 4
    %v156 = vadd.f32 %v154, %v155
    %v157 = vrot.slane %v156, 2
    %v158 = vadd.f32 %v156, %v157
    %v159 = vrot.slane %v158, 1
    %v160 = vadd.f32 %v158, %v159
    %v161 = vmul.f32 %v153, 0.125
    %v162 = vmul.f32 %v160, 0.125
    %v163 = vmul.f32 %v161, %v161
    %v164 = vsub.f32 %v162, %v163
    %v165 = vmax.f32 %v164, 0.0
    %v166 = vsub.f32 %v147, %v161
    %v167 = vadd.f32 %v165, 1e-05
    %v168 = vrsqrt.pop %v167
    %v169 = vmul.f32 %v168, %v167
    %v170 = vmul.f32 %v169, %v168
    %v171 = vmul.f32 0.5, %v170
    %v172 = vsub.f32 1.5, %v171
    %v173 = vmul.f32 %v168, %v172
    %vm174 = vweird.f32 %v167
    %vm175 = vweird.f32 %v168
    %vm176 = vmor %vm174, %vm175
    %v177 = vsel %vm176, %v168, %v173
    %v178 = vmul.f32 %v166, %v177
    %v180 = vperm.slane %v101, 0
    %v182 = vmul.f32 %v178, %v180
    %v184 = vperm.slane %v102, 0
    %v186 = vadd.f32 %v182, %v184
    %v187 = vld [vmem:[#allocation7] sm:$0xff]
    %v188 = vld [vmem:[#allocation7 + $0x8] sm:$0xff]
    %v189 = vld [vmem:[#allocation7 + $0x10] sm:$0xff]
    %v190 = vld [vmem:[#allocation7 + $0x18] sm:$0xff]
    %v191 = vld [vmem:[#allocation7 + $0x20] sm:$0xff]
    %v192 = vld [vmem:[#allocation7 + $0x28] sm:$0xff]
    %v193 = vld [vmem:[#allocation7 + $0x30] sm:$0xff]
    %v194 = vld [vmem:[#allocation7 + $0x38] sm:$0xff]
    %v195 = vld [vmem:[#allocation7 + $0x40] sm:$0xff]
    %v196 = vld [vmem:[#allocation7 + $0x48] sm:$0xff]
    %v197 = vld [vmem:[#allocation7 + $0x50] sm:$0xff]
    %v198 = vld [vmem:[#allocation7 + $0x58] sm:$0xff]
    %v199 = vld [vmem:[#allocation7 + $0x60] sm:$0xff]
    %v200 = vld [vmem:[#allocation7 + $0x68] sm:$0xff]
    %v201 = vld [vmem:[#allocation7 + $0x70] sm:$0xff]
    %v202 = vld [vmem:[#allocation7 + $0x78] sm:$0xff]
    %v204 = vperm.slane %v103, 0
    %206 = vmatpush.msra.mxu0 %v202
    %207 = vmatpush.msra.mxu0 %v201
    %208 = vmatpush.msra.mxu0 %v200
    %209 = vmatpush.msra.mxu0 %v199
    %210 = vmatpush.msra.mxu0 %v198
    %211 = vmatpush.msra.mxu0 %v197
    %212 = vmatpush.msra.mxu0 %v196
    %213 = vmatpush.msra.mxu0 %v195
    %214 = vmatpush.msra.mxu0 %v194
    %215 = vmatpush.msra.mxu0 %v193
    %216 = vmatpush.msra.mxu0 %v192
    %217 = vmatpush.msra.mxu0 %v191
    %218 = vmatpush.msra.mxu0 %v190
    %219 = vmatpush.msra.mxu0 %v189
    %220 = vmatpush.msra.mxu0 %v188
    %221 = vmatpush.msra.mxu0 %v187
    %222 = vmatmul.f32.gmra.mxu0 %v186
    %v223 = vpop.f32.mrf.mxu0
    %v224 = vadd.f32 %v204, %v223
    %225 = vdwg.mxu0
    %v226 = vmax.f32 %v224, 0.0
    %v227 = vrot.slane %v226, 4
    %v228 = vadd.f32 %v226, %v227
    %v229 = vrot.slane %v228, 2
    %v230 = vadd.f32 %v228, %v229
    %v231 = vrot.slane %v230, 1
    %v232 = vadd.f32 %v230, %v231
    %v233 = vmul.f32 %v226, %v226
    %v234 = vrot.slane %v233, 4
    %v235 = vadd.f32 %v233, %v234
    %v236 = vrot.slane %v235, 2
    %v237 = vadd.f32 %v235, %v236
    %v238 = vrot.slane %v237, 1
    %v239 = vadd.f32 %v237, %v238
    %v240 = vmul.f32 %v232, 0.125
    %v241 = vmul.f32 %v239, 0.125
    %v242 = vmul.f32 %v240, %v240
    %v243 = vsub.f32 %v241, %v242
    %v244 = vmax.f32 %v243, 0.0
    %v245 = vsub.f32 %v226, %v240
    %v246 = vadd.f32 %v244, 1e-05
    %v247 = vrsqrt.pop %v246
    %v248 = vmul.f32 %v247, %v246
    %v249 = vmul.f32 %v248, %v247
    %v250 = vmul.f32 0.5, %v249
    %v251 = vsub.f32 1.5, %v250
    %v252 = vmul.f32 %v247, %v251
    %vm253 = vweird.f32 %v246
    %vm254 = vweird.f32 %v247
    %vm255 = vmor %vm253, %vm254
    %v256 = vsel %vm255, %v247, %v252
    %v257 = vmul.f32 %v245, %v256
    %v259 = vperm.slane %v104, 0
    %v261 = vmul.f32 %v257, %v259
    %v263 = vperm.slane %v105, 0
    %v265 = vadd.f32 %v261, %v263
    %v266 = vld [vmem:[#allocation8] sm:$0xff]
    %v267 = vld [vmem:[#allocation8 + $0x8] sm:$0xff]
    %v268 = vld [vmem:[#allocation8 + $0x10] sm:$0xff]
    %v269 = vld [vmem:[#allocation8 + $0x18] sm:$0xff]
    %v270 = vld [vmem:[#allocation8 + $0x20] sm:$0xff]
    %v271 = vld [vmem:[#allocation8 + $0x28] sm:$0xff]
    %v272 = vld [vmem:[#allocation8 + $0x30] sm:$0xff]
    %v273 = vld [vmem:[#allocation8 + $0x38] sm:$0xff]
    %v274 = vld [vmem:[#allocation8 + $0x40] sm:$0xff]
    %v275 = vld [vmem:[#allocation8 + $0x48] sm:$0xff]
    %v276 = vld [vmem:[#allocation8 + $0x50] sm:$0xff]
    %v277 = vld [vmem:[#allocation8 + $0x58] sm:$0xff]
    %v278 = vld [vmem:[#allocation8 + $0x60] sm:$0xff]
    %v279 = vld [vmem:[#allocation8 + $0x68] sm:$0xff]
    %v280 = vld [vmem:[#allocation8 + $0x70] sm:$0xff]
    %v281 = vld [vmem:[#allocation8 + $0x78] sm:$0xff]
    %v283 = vperm.slane %v106, 0
    %285 = vmatpush.msra.mxu0 %v281
    %286 = vmatpush.msra.mxu0 %v280
    %287 = vmatpush.msra.mxu0 %v279
    %288 = vmatpush.msra.mxu0 %v278
    %289 = vmatpush.msra.mxu0 %v277
    %290 = vmatpush.msra.mxu0 %v276
    %291 = vmatpush.msra.mxu0 %v275
    %292 = vmatpush.msra.mxu0 %v274
    %293 = vmatpush.msra.mxu0 %v273
    %294 = vmatpush.msra.mxu0 %v272
    %295 = vmatpush.msra.mxu0 %v271
    %296 = vmatpush.msra.mxu0 %v270
    %297 = vmatpush.msra.mxu0 %v269
    %298 = vmatpush.msra.mxu0 %v268
    %299 = vmatpush.msra.mxu0 %v267
    %300 = vmatpush.msra.mxu0 %v266
    %301 = vmatmul.f32.gmra.mxu0 %v265
    %v302 = vpop.f32.mrf.mxu0
    %v303 = vadd.f32 %v283, %v302
    %304 = vdwg.mxu0
    %305 = vst [vmem:[#allocation10] sm:$0xff] %v303
    // Predicated region
    $region62: #{tpu_custom_call.1} parent=1 // pred_check
      _
    $region63: #{tpu_custom_call.1} parent=1 // pred_check_branch
      %307 = sbr.rel (0) target = $region65
    $region64: #{tpu_custom_call.1} parent=1 // pred_region
      %309 = vsyncadd [#allocation4], 0
      %s311 = sshll.u32 [#allocation10], 4
      %s312 = int_to_ptr.vmem [resolvable:$true] %s311
      %s313 = sshll.u32 %s11, 4
      %s314 = int_to_ptr.hbm [resolvable:$true] %s313
      %316 = dma.vmem_to_hbm [thread:$0]  %s312, 128, %s314, [#allocation4]
    $region65: #{tpu_custom_call.1} parent=1 // pred_fallthru
      _
    // Predicated region
    $region66: #{tpu_custom_call.1} parent=1 // pred_check
      _
    $region67: #{tpu_custom_call.1} parent=1 // pred_check_branch
      %318 = sbr.rel (0) target = $region69
    $region68: #{tpu_custom_call.1} parent=1 // pred_region
      %320 = dma.done [#allocation4], 128
    $region69: #{tpu_custom_call.1} parent=1 // pred_fallthru
      _
    %321 = vsyncpa [#allocation3], 1
    %322 = vsyncpa [#allocation6], 1
    %323 = vsyncpa [#allocation9], 1
    %324 = vsyncpa [#allocation4], 1

</llo_original>
